<compile_context>
chip_gen: v6e
topology: v6e:2x2x1
jax: 0.10.0
libtpu: 0.0.40
codegen_flags: <defaults>
</compile_context>

<pallas_src>
import functools

import jax
import jax.numpy as jnp
from jax import lax
from jax.experimental import pallas as pl
from jax.experimental.pallas import tpu as pltpu


def _round_up(x, m):
    return ((x + m - 1) // m) * m


def _ce_loss_kernel(logits_ref, labels_ref, wrow_ref, num_ref, den_ref):
    """One (row_tile, C) tile of weighted cross entropy -> (1,1) partial num/den."""
    x = logits_ref[...].astype(jnp.float32)       # (NT, C)   arithmetic stays f32
    y = labels_ref[...]                           # (NT, 1)   int32, -1 => ignore/pad
    w = wrow_ref[...]                             # (NT, 1)   f32, already w[y_i]

    # numerically-stable log-sum-exp along the class (lane) axis
    m = jnp.max(x, axis=-1, keepdims=True)                                  # (NT,1)
    lse = jnp.log(jnp.sum(jnp.exp(x - m), axis=-1, keepdims=True)) + m      # (NT,1)

    # fused gather of x[i, y_i]: one boolean mask, no float one-hot materialization
    col = lax.broadcasted_iota(jnp.int32, x.shape, 1)                       # (NT,C)
    x_y = jnp.sum(jnp.where(col == y, x, 0.0), axis=-1, keepdims=True)      # (NT,1)

    # mask pad / ignored rows (label < 0).  Out-of-bounds rows of the last tile may
    # contain garbage logits (-> possibly NaN lse), but `where` selects 0 for them.
    valid = y >= 0
    contrib = jnp.where(valid, w * (lse - x_y), 0.0)                        # (NT,1)
    wsum = jnp.where(valid, w, 0.0)                                         # (NT,1)

    num_ref[...] = jnp.sum(contrib, axis=0, keepdims=True)
    den_ref[...] = jnp.sum(wsum, axis=0, keepdims=True)


def _vmem_budgets():
    """(per-tile byte budget, vmem_limit_bytes), generation-aware."""
    cap = None
    try:
        cap = getattr(pltpu.get_tpu_info(), "vmem_capacity_bytes", None)
    except Exception:
        cap = None
    if cap is None or cap <= 80 * 1024 * 1024:       # v7x (64 MiB / TC) or unknown
        return 24 * 1024 * 1024, 56 * 1024 * 1024
    return 80 * 1024 * 1024, 100 * 1024 * 1024       # v5e / v6e (128 MiB)


@functools.partial(jax.jit, static_argnames=("row_tile",))
def ce_loss_pallas(predicted, labels, weight_ce, *, row_tile=None):
    """predicted: (N, C) float logits (any float dtype); labels: (N,) int class ids;
    weight_ce: (C,) float per-class weights.  Returns the scalar weighted-mean CE."""
    n, c = predicted.shape
    itemsize = jnp.dtype(predicted.dtype).itemsize

    tile_budget, vmem_limit = _vmem_budgets()
    if row_tile is None:
        # Real per-element working set: double-buffered native-dtype input plus the
        # in-kernel f32 temporaries (x.astype(f32), exp(x-m), iota/mask, where result).
        bytes_per_row = c * (2 * itemsize + 16)
        row_tile = tile_budget // max(bytes_per_row, 1)
    row_tile = max(8, min(int(row_tile), 8192, _round_up(n, 8)))
    row_tile = (row_tile // 8) * 8

    num_tiles = pl.cdiv(n, row_tile)
    n_pad = num_tiles * row_tile

    # O(N) per-row weight gather in the wrapper; pad only the tiny per-row arrays.
    labels_i32 = labels.astype(jnp.int32)
    w_row = jnp.where(
        labels_i32 >= 0,
        weight_ce.astype(jnp.float32)[jnp.clip(labels_i32, 0, c - 1)],
        0.0,
    )
    pad = n_pad - n
    labels2d = jnp.pad(labels_i32, (0, pad), constant_values=-1).reshape(n_pad, 1)
    wrow2d = jnp.pad(w_row, (0, pad)).reshape(n_pad, 1)

    num, den = pl.pallas_call(
        _ce_loss_kernel,
        out_shape=(
            jax.ShapeDtypeStruct((num_tiles, 1, 1), jnp.float32),
            jax.ShapeDtypeStruct((num_tiles, 1, 1), jnp.float32),
        ),
        grid=(num_tiles,),
        in_specs=[
            # Logits read in place: full-C block, ragged last row tile clamped by
            # the pipeline (garbage rows masked in-kernel via label == -1).
            pl.BlockSpec((row_tile, c), lambda i: (i, 0)),
            pl.BlockSpec((row_tile, 1), lambda i: (i, 0)),
            pl.BlockSpec((row_tile, 1), lambda i: (i, 0)),
        ],
        out_specs=(
            pl.BlockSpec((None, 1, 1), lambda i: (i, 0, 0)),
            pl.BlockSpec((None, 1, 1), lambda i: (i, 0, 0)),
        ),
        compiler_params=pltpu.CompilerParams(
            dimension_semantics=("parallel",),
            vmem_limit_bytes=vmem_limit,
        ),
        cost_estimate=pl.CostEstimate(
            flops=8 * n * c,
            transcendentals=n * c,
            bytes_accessed=n * c * itemsize + 3 * n_pad * 4 + 2 * num_tiles * 4,
        ),
    )(predicted, labels2d, wrow2d)

    # weighted-mean reduction across per-tile partials (PyTorch 'mean' semantics)
    return jnp.sum(num) / jnp.sum(den)


def _ce_loss_ref(predicted, labels, weight_ce):
    # pure-JAX reference of torch.nn.CrossEntropyLoss(weight=w), 'mean' reduction
    x = predicted.astype(jnp.float32)
    logp = jax.nn.log_softmax(x, axis=-1)
    sel = jnp.take_along_axis(logp, labels[:, None].astype(jnp.int32), axis=-1)[:, 0]
    w_i = weight_ce.astype(jnp.float32)[labels]
    return jnp.sum(-w_i * sel) / jnp.sum(w_i)


if __name__ == "__main__":
    key = jax.random.PRNGKey(0)
    k1, k2, k3 = jax.random.split(key, 3)

    # small shapes consistent with the module's forward: logits (N, C), labels (N,)
    N, C = 8, 16
    predicted = jax.random.normal(k1, (N, C), dtype=jnp.float32).astype(jnp.bfloat16)
    labels = jax.random.randint(k2, (N,), 0, C, dtype=jnp.int32)
    weight_ce = 0.5 + jax.random.uniform(k3, (C,), dtype=jnp.float32)

    loss = ce_loss_pallas(predicted, labels, weight_ce)
    jax.block_until_ready(loss)
    ref = _ce_loss_ref(predicted, labels, weight_ce)
    assert jnp.allclose(loss, ref, atol=1e-4, rtol=1e-4), (loss, ref)

    # second check: ragged C (not a multiple of 128), ragged rows, forced multi-tile
    k4, k5, k6 = jax.random.split(jax.random.PRNGKey(1), 3)
    N2, C2 = 50, 200
    pred2 = jax.random.normal(k4, (N2, C2), dtype=jnp.float32)
    lab2 = jax.random.randint(k5, (N2,), 0, C2, dtype=jnp.int32)
    w2 = 0.5 + jax.random.uniform(k6, (C2,), dtype=jnp.float32)
    loss2 = ce_loss_pallas(pred2, lab2, w2, row_tile=8)   # forces >1 tile + OOB rows
    jax.block_until_ready(loss2)
    ref2 = _ce_loss_ref(pred2, lab2, w2)
    assert jnp.allclose(loss2, ref2, atol=1e-4, rtol=1e-4), (loss2, ref2)

    print("KERNEL_OK")
</pallas_src>

<mosaic_0001>
module attributes {stable_mosaic.version = 11 : i64} {
  func.func @_ce_loss_kernel(%arg0: i32, %arg1: memref<8x16xbf16, #tpu.memory_space<vmem>>, %arg2: memref<8x1xi32, #tpu.memory_space<vmem>>, %arg3: memref<8x1xf32, #tpu.memory_space<vmem>>, %arg4: memref<1x1x1xf32, #tpu.memory_space<vmem>>, %arg5: memref<1x1x1xf32, #tpu.memory_space<vmem>>) attributes {dimension_semantics = [#tpu.dimension_semantics<parallel>], iteration_bounds = array<i64: 1>, scalar_prefetch = 0 : i64, scratch_operands = 0 : i64, tpu.core_type = #tpu.core_type<tc>, window_params = [{transform_indices = @transform_0, window_bounds = array<i64: 8, 16>}, {transform_indices = @transform_1, window_bounds = array<i64: 8, 1>}, {transform_indices = @transform_2, window_bounds = array<i64: 8, 1>}, {transform_indices = @transform_3, window_bounds = array<i64: 1, 1, 1>}, {transform_indices = @transform_4, window_bounds = array<i64: 1, 1, 1>}]} {
    %c0 = arith.constant 0 : index
    %c0_0 = arith.constant 0 : index
    %0 = vector.load %arg1[%c0, %c0_0] : memref<8x16xbf16, #tpu.memory_space<vmem>>, vector<8x16xbf16>
    %1 = arith.extf %0 : vector<8x16xbf16> to vector<8x16xf32>
    %c0_1 = arith.constant 0 : index
    %c0_2 = arith.constant 0 : index
    %2 = vector.load %arg2[%c0_1, %c0_2] : memref<8x1xi32, #tpu.memory_space<vmem>>, vector<8x1xi32>
    %c0_3 = arith.constant 0 : index
    %c0_4 = arith.constant 0 : index
    %3 = vector.load %arg3[%c0_3, %c0_4] : memref<8x1xf32, #tpu.memory_space<vmem>>, vector<8x1xf32>
    %cst = arith.constant dense<0xFF800000> : vector<8xf32>
    %4 = vector.multi_reduction <maximumf>, %1, %cst [1] : vector<8x16xf32> to vector<8xf32>
    %5 = vector.shape_cast %4 : vector<8xf32> to vector<8x1xf32>
    %6 = vector.broadcast %5 : vector<8x1xf32> to vector<8x16xf32>
    %7 = arith.subf %1, %6 : vector<8x16xf32>
    %8 = math.exp %7 : vector<8x16xf32>
    %cst_5 = arith.constant dense<0.000000e+00> : vector<8xf32>
    %9 = vector.multi_reduction <add>, %8, %cst_5 [1] : vector<8x16xf32> to vector<8xf32>
    %10 = vector.shape_cast %9 : vector<8xf32> to vector<8x1xf32>
    %11 = math.log %10 : vector<8x1xf32>
    %12 = arith.addf %11, %5 : vector<8x1xf32>
    %13 = tpu.iota {dimensions = array<i32: 1>} : vector<8x16xi32>
    %14 = vector.broadcast %2 : vector<8x1xi32> to vector<8x16xi32>
    %15 = arith.cmpi eq, %13, %14 : vector<8x16xi32>
    %cst_6 = arith.constant 0.000000e+00 : f32
    %16 = vector.broadcast %cst_6 : f32 to vector<8x16xf32>
    %17 = arith.select %15, %1, %16 : vector<8x16xi1>, vector<8x16xf32>
    %cst_7 = arith.constant dense<0.000000e+00> : vector<8xf32>
    %18 = vector.multi_reduction <add>, %17, %cst_7 [1] : vector<8x16xf32> to vector<8xf32>
    %19 = vector.shape_cast %18 : vector<8xf32> to vector<8x1xf32>
    %c0_i32 = arith.constant 0 : i32
    %20 = vector.broadcast %c0_i32 : i32 to vector<8x1xi32>
    %21 = arith.cmpi sge, %2, %20 : vector<8x1xi32>
    %22 = arith.subf %12, %19 : vector<8x1xf32>
    %23 = arith.mulf %3, %22 : vector<8x1xf32>
    %cst_8 = arith.constant 0.000000e+00 : f32
    %24 = vector.broadcast %cst_8 : f32 to vector<8x1xf32>
    %25 = arith.select %21, %23, %24 : vector<8x1xi1>, vector<8x1xf32>
    %cst_9 = arith.constant 0.000000e+00 : f32
    %26 = vector.broadcast %cst_9 : f32 to vector<8x1xf32>
    %27 = arith.select %21, %3, %26 : vector<8x1xi1>, vector<8x1xf32>
    %cst_10 = arith.constant dense<0.000000e+00> : vector<1xf32>
    %28 = vector.multi_reduction <add>, %25, %cst_10 [0] : vector<8x1xf32> to vector<1xf32>
    %29 = vector.shape_cast %28 : vector<1xf32> to vector<1x1xf32>
    %c0_11 = arith.constant 0 : index
    %c0_12 = arith.constant 0 : index
    %c0_13 = arith.constant 0 : index
    %30 = vector.load %arg4[%c0_11, %c0_12, %c0_13] : memref<1x1x1xf32, #tpu.memory_space<vmem>>, vector<1x1x1xf32>
    %31 = vector.shape_cast %30 : vector<1x1x1xf32> to vector<1x1xf32>
    %32 = vector.shape_cast %29 : vector<1x1xf32> to vector<1x1x1xf32>
    tpu.vector_store %arg4[%c0_11, %c0_12, %c0_13], %32 {strides = array<i32>} : memref<1x1x1xf32, #tpu.memory_space<vmem>>, vector<1x1x1xf32>,
    %cst_14 = arith.constant dense<0.000000e+00> : vector<1xf32>
    %33 = vector.multi_reduction <add>, %27, %cst_14 [0] : vector<8x1xf32> to vector<1xf32>
    %34 = vector.shape_cast %33 : vector<1xf32> to vector<1x1xf32>
    %c0_15 = arith.constant 0 : index
    %c0_16 = arith.constant 0 : index
    %c0_17 = arith.constant 0 : index
    %35 = vector.load %arg5[%c0_15, %c0_16, %c0_17] : memref<1x1x1xf32, #tpu.memory_space<vmem>>, vector<1x1x1xf32>
    %36 = vector.shape_cast %35 : vector<1x1x1xf32> to vector<1x1xf32>
    %37 = vector.shape_cast %34 : vector<1x1xf32> to vector<1x1x1xf32>
    tpu.vector_store %arg5[%c0_15, %c0_16, %c0_17], %37 {strides = array<i32>} : memref<1x1x1xf32, #tpu.memory_space<vmem>>, vector<1x1x1xf32>,
    return
  }
  func.func @transform_0(%arg0: i32) -> (i32, i32) {
    %c0_i32 = arith.constant 0 : i32
    %c0_i32_0 = arith.constant 0 : i32
    return %arg0, %c0_i32 : i32, i32
  }
  func.func @transform_1(%arg0: i32) -> (i32, i32) {
    %c0_i32 = arith.constant 0 : i32
    %c0_i32_0 = arith.constant 0 : i32
    return %arg0, %c0_i32 : i32, i32
  }
  func.func @transform_2(%arg0: i32) -> (i32, i32) {
    %c0_i32 = arith.constant 0 : i32
    %c0_i32_0 = arith.constant 0 : i32
    return %arg0, %c0_i32 : i32, i32
  }
  func.func @transform_3(%arg0: i32) -> (i32, i32, i32) {
    %c0_i32 = arith.constant 0 : i32
    %c0_i32_0 = arith.constant 0 : i32
    %c0_i32_1 = arith.constant 0 : i32
    return %arg0, %c0_i32, %c0_i32_0 : i32, i32, i32
  }
  func.func @transform_4(%arg0: i32) -> (i32, i32, i32) {
    %c0_i32 = arith.constant 0 : i32
    %c0_i32_0 = arith.constant 0 : i32
    %c0_i32_1 = arith.constant 0 : i32
    return %arg0, %c0_i32, %c0_i32_0 : i32, i32, i32
  }
}

</mosaic_0001>

<llo_original>
// kernel: ce_loss_pallas.1
$region0: #{ce_loss_pallas.1}
  #allocation0 [shape = 'u32[]', space=smem, size = 0x4, offset = 0x4, fixed_abs, tag = 'smem constant byte address 0x4 - core index']
  #allocation1 [shape = 'u32[144,128]{1,0:T(1,128)}', space=vmem, size = 0x12000, scoped, tag = 'internal scratch']
  %s0 = inlined_call_operand.vmem [shape: bf16[8,16], index: 0, kind: input, shape index: {}]
  %s1 = inlined_call_operand.vmem [shape: s32[8,1], index: 1, kind: input, shape index: {}]
  %s2 = inlined_call_operand.vmem [shape: f32[8,1], index: 2, kind: input, shape index: {}]
  %s3 = inlined_call_operand.hbm [shape: f32[1,1,1], index: 3, kind: output, shape index: {0}]
  %s4 = inlined_call_operand.hbm [shape: f32[1,1,1], index: 4, kind: output, shape index: {1}]
  %5 = xla_tuple %s3, %s4
  %s6 = sld [smem:[#allocation0]]
  $region30: #{ce_loss_pallas.1} parent=0
    _
  %s8 = ssub.s32 1, %s6
  %s9 = scalar_select 0, %s8, %s6
  $region1: #{ce_loss_pallas.1} parent=0
    #allocation2 [shape = 'u8[512]{0}', space=vmem, size = 0x400, scoped, tag = 'output window, operand 0, single buffered']
    #allocation3 [shape = 's32[1]{0}', space=sflag, size = 0x4, scoped, tag = 'scoped memory for ce_loss_pallas.1']
    #allocation4 [shape = 'u8[512]{0}', space=vmem, size = 0x400, scoped, tag = 'output window, operand 1, single buffered']
    #allocation5 [shape = 's32[1]{0}', space=sflag, size = 0x4, scoped, tag = 'scoped memory for ce_loss_pallas.1']
    %10 = vsyncpa [#allocation3], 0
    %11 = vsyncpa [#allocation5], 0
    // Predicated region
    $region2: #{ce_loss_pallas.1} parent=1 // pred_check
      _
    $region3: #{ce_loss_pallas.1} parent=1 // pred_check_branch
      %13 = sbr.rel (0) target = $region5
    $region4: #{ce_loss_pallas.1} parent=1 // pred_region
      _
    $region5: #{ce_loss_pallas.1} parent=1 // pred_fallthru
      _
    // Predicated region
    $region6: #{ce_loss_pallas.1} parent=1 // pred_check
      _
    $region7: #{ce_loss_pallas.1} parent=1 // pred_check_branch
      %15 = sbr.rel (0) target = $region9
    $region8: #{ce_loss_pallas.1} parent=1 // pred_region
      _
    $region9: #{ce_loss_pallas.1} parent=1 // pred_fallthru
      _
    // Predicated region
    $region10: #{ce_loss_pallas.1} parent=1 // pred_check
      _
    $region11: #{ce_loss_pallas.1} parent=1 // pred_check_branch
      %17 = sbr.rel (0) target = $region13
    $region12: #{ce_loss_pallas.1} parent=1 // pred_region
      _
    $region13: #{ce_loss_pallas.1} parent=1 // pred_fallthru
      _
    %v18 = vld [vmem:[%s0] sm:$0xf]
    %v19 = vunpack.c.l.bf16 %v18
    %v20 = vld [vmem:[%s1] sm:$0xff]
    %v21 = vld [vmem:[%s2] sm:$0xff]
    %vm22 = vcmask 130048
    %v23 = vsel %vm22, %v19, -inf
    %24 = vmax.xlane.f32.xlu0 %v23
    %v25 = vpop.xlane.xlu0 %24
    %v26 = vsub.f32 %v19, %v25
    %v27 = vmul.f32 %v26, 1.442695
    %v28 = vpow.pop %v27
    %v29 = vsel %vm22, %v28, 0.0
    %30 = vadd.xlane.f32.xlu0 %v29
    %v31 = vpop.xlane.xlu0 %30
    %v32 = vlog2.pop %v31
    %v33 = vmul.f32 %v32, 0.6931472
    %v34 = vadd.f32 %v33, %v25
    %v35 = vlaneseq
    %v36 = vand.u32 %v35, 127
    %37 = vset.pattern.permute.xlu0 0
    %38 = vperm.xlu0 %37, %v20
    %v39 = vpop.permute.xlu0 %38
    %vm40 = vcmp.eq.s32.totalorder %v36, %v39
    %v41 = vsel %vm40, %v19, 0.0
    %v42 = vsel %vm22, %v41, 0.0
    %43 = vadd.xlane.f32.xlu0 %v42
    %v44 = vpop.xlane.xlu0 %43
    %vm45 = vcmp.ge.s32.totalorder %v20, 0
    %v46 = vsub.f32 %v34, %v44
    %v47 = vmul.f32 %v21, %v46
    %v48 = vsel %vm45, %v47, 0.0
    %v49 = vsel %vm45, %v21, 0.0
    %vm50 = vcmask 7168
    %v51 = vsel %vm50, %v48, 0.0
    %v52 = vrot.slane %v51, 4
    %v53 = vadd.f32 %v51, %v52
    %v54 = vrot.slane %v53, 2
    %v55 = vadd.f32 %v53, %v54
    %v56 = vrot.slane %v55, 1
    %v57 = vadd.f32 %v55, %v56
    %vm58 = vcmask 0
    %59 = vst.msk [vmem:[#allocation2] sm:$0x1] %vm58, %v57
    %v60 = vsel %vm50, %v49, 0.0
    %v61 = vrot.slane %v60, 4
    %v62 = vadd.f32 %v60, %v61
    %v63 = vrot.slane %v62, 2
    %v64 = vadd.f32 %v62, %v63
    %v65 = vrot.slane %v64, 1
    %v66 = vadd.f32 %v64, %v65
    %67 = vst.msk [vmem:[#allocation4] sm:$0x1] %vm58, %v66
    // Predicated region
    $region14: #{ce_loss_pallas.1} parent=1 // pred_check
      _
    $region15: #{ce_loss_pallas.1} parent=1 // pred_check_branch
      %69 = sbr.rel (0) target = $region17
    $region16: #{ce_loss_pallas.1} parent=1 // pred_region
      %s71 = ssub.s32 16, 16
      %72 = vsyncadd [#allocation3], %s71
      %s74 = sshll.u32 [#allocation2], 4
      %s75 = int_to_ptr.vmem [resolvable:$true] %s74
      %77 = dma.vmem_to_hbm [thread:$0]  %s75, 16, %s3, [#allocation3]
    $region17: #{ce_loss_pallas.1} parent=1 // pred_fallthru
      _
    // Predicated region
    $region18: #{ce_loss_pallas.1} parent=1 // pred_check
      _
    $region19: #{ce_loss_pallas.1} parent=1 // pred_check_branch
      %79 = sbr.rel (0) target = $region21
    $region20: #{ce_loss_pallas.1} parent=1 // pred_region
      %s81 = ssub.s32 16, 16
      %82 = vsyncadd [#allocation5], %s81
      %s84 = sshll.u32 [#allocation4], 4
      %s85 = int_to_ptr.vmem [resolvable:$true] %s84
      %87 = dma.vmem_to_hbm [thread:$0]  %s85, 16, %s4, [#allocation5]
    $region21: #{ce_loss_pallas.1} parent=1 // pred_fallthru
      _
    // Predicated region
    $region22: #{ce_loss_pallas.1} parent=1 // pred_check
      _
    $region23: #{ce_loss_pallas.1} parent=1 // pred_check_branch
      %89 = sbr.rel (0) target = $region25
    $region24: #{ce_loss_pallas.1} parent=1 // pred_region
      %90 = dma.done [#allocation3], 16
    $region25: #{ce_loss_pallas.1} parent=1 // pred_fallthru
      _
    // Predicated region
    $region26: #{ce_loss_pallas.1} parent=1 // pred_check
      _
    $region27: #{ce_loss_pallas.1} parent=1 // pred_check_branch
      %92 = sbr.rel (0) target = $region29
    $region28: #{ce_loss_pallas.1} parent=1 // pred_region
      %93 = dma.done [#allocation5], 16
    $region29: #{ce_loss_pallas.1} parent=1 // pred_fallthru
      _
    %94 = vsyncpa [#allocation3], 1
    %95 = vsyncpa [#allocation5], 1

</llo_original>
